<compile_context>
chip_gen: v5e
topology: v5e:2x2
jax: 0.10.0
libtpu: 0.0.40
codegen_flags: <defaults>
</compile_context>

<pallas_src>
import numpy as np
import jax
import jax.numpy as jnp
from jax.experimental import pallas as pl
from jax.experimental.pallas import tpu as pltpu


def _round_up(x, m):
    return ((x + m - 1) // m) * m


# ---------------------------------------------------------------------------
# Fast path: both tables VMEM-resident; gather = one-hot matmul on the MXU.
# ---------------------------------------------------------------------------
def _resident_kernel(aux_ref,    # VMEM (C, 4)  int32: [widx, didx, pos, len]
                     wtab_ref,   # VMEM (Vw_p, Dw) f32, resident (const index_map)
                     dtab_ref,   # VMEM (Vd_p, Dp) f32, resident (const index_map)
                     out_ref):   # VMEM (C, Dw+Dp) f32
    C = out_ref.shape[0]
    Vw, Dw = wtab_ref.shape
    Vd = dtab_ref.shape[0]

    widx = aux_ref[:, 0:1]
    didx = aux_ref[:, 1:2]
    pos = aux_ref[:, 2:3]
    ln = aux_ref[:, 3:4]
    maskb = pos < ln                                        # (C, 1) bool

    # One-hot row selection on the MXU (exact 0/1 weights).
    oh_w = (widx == jax.lax.broadcasted_iota(jnp.int32, (C, Vw), 1)
            ).astype(jnp.float32)
    oh_d = (didx == jax.lax.broadcasted_iota(jnp.int32, (C, Vd), 1)
            ).astype(jnp.float32)
    word = jnp.dot(oh_w, wtab_ref[...], preferred_element_type=jnp.float32,
                   precision=jax.lax.Precision.HIGHEST)
    dist = jnp.dot(oh_d, dtab_ref[...], preferred_element_type=jnp.float32,
                   precision=jax.lax.Precision.HIGHEST)

    # concat([word, dist], -1) * mask  ->  two lane-dense stores into the tile.
    out_ref[:, :Dw] = jnp.where(maskb, word, 0.0)
    out_ref[:, Dw:] = jnp.where(maskb, dist, 0.0)


# ---------------------------------------------------------------------------
# Large-vocab fallback: word table in HBM (per-row DMA gather, predicated on
# validity, issue loop unrolled 8x); dist table VMEM-resident (one-hot MXU).
# ---------------------------------------------------------------------------
def _hbm_word_kernel(widx_sm,    # SMEM (N_pad,) int32  (scalar prefetch)
                     valid_sm,   # SMEM (N_pad,) int32  (scalar prefetch)
                     aux_ref,    # VMEM (C, 4) int32: [widx, didx, pos, len]
                     wtab_hbm,   # ANY  (Vw_p, Dw) f32  word table (stays in HBM)
                     dtab_ref,   # VMEM (Vd_p, Dp) f32  resident dist table
                     out_ref,    # VMEM (C, Dw+Dp) f32
                     wbuf,       # VMEM (C, Dw) f32 gather landing buffer
                     sem):       # DMA semaphore (1,)
    C = out_ref.shape[0]
    Dw = wtab_hbm.shape[1]
    Vd = dtab_ref.shape[0]
    row0 = pl.program_id(0) * C

    # --- Issue: one row DMA per *valid* row.  Manually unrolled by 8 so the
    # scalar loads co-issue with the descriptor pushes; all SMEM reads happen
    # before any .wait() below (sst->sld forwarding is preserved).
    def _issue8(j, count):
        base = row0 + j * 8
        for k in range(8):
            w = widx_sm[base + k]
            v = valid_sm[base + k]
            dst = j * 8 + k
            @pl.when(v > 0)
            def _start(w=w, dst=dst):
                pltpu.make_async_copy(wtab_hbm.at[pl.ds(w, 1)],
                                      wbuf.at[pl.ds(dst, 1)],
                                      sem.at[0]).start()
            count = count + v
        return count

    n_issued = jax.lax.fori_loop(0, C // 8, _issue8, jnp.int32(0))

    # --- Overlap: resident dist gather + mask while word-row DMAs are in flight.
    didx = aux_ref[:, 1:2]
    pos = aux_ref[:, 2:3]
    ln = aux_ref[:, 3:4]
    maskb = pos < ln
    oh_d = (didx == jax.lax.broadcasted_iota(jnp.int32, (C, Vd), 1)
            ).astype(jnp.float32)
    dist = jnp.dot(oh_d, dtab_ref[...], preferred_element_type=jnp.float32,
                   precision=jax.lax.Precision.HIGHEST)
    out_ref[:, Dw:] = jnp.where(maskb, dist, 0.0)

    # --- Drain: one wait per issued copy.  All copies have identical byte
    # counts, so a same-shaped descriptor wait is equivalent; every copy has
    # landed before any wbuf read below (no compute interleaved in the drain).
    def _drain(_, carry):
        pltpu.make_async_copy(wtab_hbm.at[pl.ds(0, 1)],
                              wbuf.at[pl.ds(0, 1)],
                              sem.at[0]).wait()
        return carry

    jax.lax.fori_loop(0, n_issued, _drain, jnp.int32(0))

    # Skipped (masked / padded) rows hold stale VMEM garbage: SELECT rather
    # than multiply so they become exact zeros even if the garbage is NaN/Inf.
    out_ref[:, :Dw] = jnp.where(maskb, wbuf[...], 0.0)


# ---------------------------------------------------------------------------
# Wrapper
# ---------------------------------------------------------------------------
def embedding_forward(word_idx, dist_idx, length, word_table, dist_table, *,
                      rows_per_step=1024, force_hbm_word_table=False):
    """word_idx, dist_idx: [B, L] int; length: [B] int;
       word_table: [Vw, Dw] f32; dist_table: [Vd, Dp] f32 (row 0 = padding row).
       Returns [B, L, Dw + Dp] float32 (same semantics as Embedding.forward)."""
    B, L = word_idx.shape
    word_table = jnp.asarray(word_table, jnp.float32)
    dist_table = jnp.asarray(dist_table, jnp.float32)
    Vw, Dw = word_table.shape
    Vd, Dp = dist_table.shape
    D = Dw + Dp
    N = B * L

    # Pad table rows to a sublane multiple (extra rows are never selected).
    def _pad_rows(tab):
        r = (-tab.shape[0]) % 8
        return jnp.pad(tab, ((0, r), (0, 0))) if r else tab
    wtab = _pad_rows(word_table)
    dtab = _pad_rows(dist_table)
    Vw_p, Vd_p = wtab.shape[0], dtab.shape[0]

    # ---- VMEM budget (generation aware: v7x 64 MiB, v5e/v6e 128 MiB). ----
    try:
        phys_vmem = int(pltpu.get_tpu_info().vmem_capacity_bytes)
    except Exception:
        phys_vmem = 64 * 1024 * 1024                  # conservative (v7x) default
    vmem_limit = max(16 << 20,
                     min(phys_vmem * 3 // 4, phys_vmem - (8 << 20)))

    # ---- Row-chunk size: multiple of 8 sublanes, large to amortize grid
    # overhead, but split so both v7x TensorCores get work. ----
    C = max(8, min(int(rows_per_step), _round_up(N, 8)))
    C = (C // 8) * 8
    if N > 8 and -(-N // C) < 2:
        C = max(8, _round_up(-(-N // 2), 8))

    # ---- Residency decision (fast path) with headroom for pipeline tiles and
    # the (C, V) one-hot intermediates. ----
    def _fits_resident(c):
        tab_bytes = 2 * (Vw_p * Dw + Vd_p * Dp) * 4       # count double-buffering
        tile_bytes = 2 * (c * D * 4) + 2 * (c * 128 * 4)  # out tiles + padded aux
        onehot_bytes = c * (Vw_p + Vd_p) * 4
        return (tab_bytes + tile_bytes + onehot_bytes + (4 << 20) <= vmem_limit
                and c * Vw_p * 4 <= (8 << 20))
    use_resident = (not force_hbm_word_table) and _fits_resident(C)
    if not use_resident:
        C = max(8, (min(C, 512) // 8) * 8)            # bound in-flight row DMAs

    n_chunks = -(-N // C)
    N_pad = n_chunks * C
    pad = N_pad - N

    # ---- Per-row bookkeeping: [word_idx, dist_idx, position, length]. ----
    widx = jnp.clip(word_idx.reshape(-1).astype(jnp.int32), 0, Vw - 1)
    didx = jnp.clip(dist_idx.reshape(-1).astype(jnp.int32), 0, Vd - 1)
    pos = jnp.tile(jnp.arange(L, dtype=jnp.int32), B)
    lens = jnp.repeat(length.astype(jnp.int32), L)
    if pad:
        widx = jnp.pad(widx, (0, pad))                # padded rows select row 0 ...
        didx = jnp.pad(didx, (0, pad))
        pos = jnp.pad(pos, (0, pad))
        lens = jnp.pad(lens, (0, pad))                # ... and are masked to zero
    aux = jnp.stack([widx, didx, pos, lens], axis=1)  # (N_pad, 4) int32

    cp = pltpu.CompilerParams(dimension_semantics=("parallel",),
                              vmem_limit_bytes=int(vmem_limit))
    out_shape = jax.ShapeDtypeStruct((N_pad, D), jnp.float32)

    if use_resident:
        grid_spec = pltpu.PrefetchScalarGridSpec(
            num_scalar_prefetch=0,
            grid=(n_chunks,),
            in_specs=[
                pl.BlockSpec((C, 4), lambda c: (c, 0)),
                pl.BlockSpec((Vw_p, Dw), lambda c: (0, 0)),   # resident word table
                pl.BlockSpec((Vd_p, Dp), lambda c: (0, 0)),   # resident dist table
            ],
            out_specs=pl.BlockSpec((C, D), lambda c: (c, 0)),
        )
        out = pl.pallas_call(_resident_kernel, out_shape=out_shape,
                             grid_spec=grid_spec,
                             compiler_params=cp)(aux, wtab, dtab)
    else:
        # TODO(synk): for very large B*L the two scalar-prefetched int32 index
        # arrays may exceed SMEM capacity; split the call over row ranges then.
        valid = (pos < lens).astype(jnp.int32)        # DMA only un-masked rows
        grid_spec = pltpu.PrefetchScalarGridSpec(
            num_scalar_prefetch=2,                    # widx, valid -> SMEM
            grid=(n_chunks,),
            in_specs=[
                pl.BlockSpec((C, 4), lambda c, w, v: (c, 0)),
                pl.BlockSpec(memory_space=pl.ANY),            # word table in HBM
                pl.BlockSpec((Vd_p, Dp), lambda c, w, v: (0, 0)),  # resident dist
            ],
            out_specs=pl.BlockSpec((C, D), lambda c, w, v: (c, 0)),
            scratch_shapes=[
                pltpu.VMEM((C, Dw), jnp.float32),
                pltpu.SemaphoreType.DMA((1,)),
            ],
        )
        out = pl.pallas_call(_hbm_word_kernel, out_shape=out_shape,
                             grid_spec=grid_spec,
                             compiler_params=cp)(widx, valid, aux, wtab, dtab)

    return out[:N].reshape(B, L, D)


def clip_two_dimensions(mat, norm=3.0):
    # Plain-JAX equivalent of clipTwoDimentions (weight clipping utility used
    # by clipEmbedding; not part of forward()).
    col_norms = jnp.sqrt((mat ** 2).sum(0, keepdims=True))
    desired = jnp.clip(col_norms, 0.0, norm)
    return mat * (desired / (1e-07 + col_norms))


if __name__ == "__main__":
    key = jax.random.PRNGKey(0)
    k1, k2, k3, k4 = jax.random.split(key, 4)

    # Small deterministic config (lane-aligned feature dims like the module's
    # typical setups; the module treats both dims as free hyperparameters).
    B = 2
    max_length = 16                          # L
    vocab = 64                               # word_vec_mat.shape[0]
    word_dim = 128                           # word_vec_mat.shape[1]
    pos_dim = 128                            # pos_embedding_dim
    dist_vocab = 2 * (max_length - 1) + 1    # = 31, as in nn.Embedding(2*(L-1)+1, ...)

    # Parameters; dist padding_idx=0 -> zero row.
    word_table = jax.random.normal(k1, (vocab, word_dim), dtype=jnp.float32)
    dist_table = jax.random.normal(k2, (dist_vocab, pos_dim), dtype=jnp.float32)
    dist_table = dist_table.at[0].set(0.0)

    # Inputs.
    word_idx = jax.random.randint(k3, (B, max_length), 0, vocab, dtype=jnp.int32)
    dist_idx = jax.random.randint(k4, (B, max_length), 0, dist_vocab, dtype=jnp.int32)
    length = jnp.array([max_length, max_length // 2], dtype=jnp.int32)

    # Pure-JAX reference.
    ref = jnp.concatenate([word_table[word_idx], dist_table[dist_idx]], axis=-1)
    ref_mask = (jnp.arange(max_length)[None, :] < length[:, None]
                ).astype(jnp.float32)[..., None]
    ref = np.asarray(ref * ref_mask)

    # Fast path (VMEM-resident tables, one-hot MXU gather).
    out_fast = jax.block_until_ready(
        embedding_forward(word_idx, dist_idx, length, word_table, dist_table))
    assert out_fast.shape == (B, max_length, word_dim + pos_dim)
    assert np.allclose(np.asarray(out_fast), ref, atol=5e-5, rtol=1e-5), \
        "resident-path mismatch vs reference"

    # Large-vocab fallback path (word table in HBM, predicated row DMAs).
    out_hbm = jax.block_until_ready(
        embedding_forward(word_idx, dist_idx, length, word_table, dist_table,
                          force_hbm_word_table=True))
    assert np.allclose(np.asarray(out_hbm), ref, atol=5e-5, rtol=1e-5), \
        "HBM-gather-path mismatch vs reference"

    print("KERNEL_OK")
</pallas_src>

<mosaic_0001>
module attributes {stable_mosaic.version = 11 : i64} {
  func.func @_resident_kernel(%arg0: i32, %arg1: memref<16x4xi32, #tpu.memory_space<vmem>>, %arg2: memref<64x128xf32, #tpu.memory_space<vmem>>, %arg3: memref<32x128xf32, #tpu.memory_space<vmem>>, %arg4: memref<16x256xf32, #tpu.memory_space<vmem>>) attributes {dimension_semantics = [#tpu.dimension_semantics<parallel>], iteration_bounds = array<i64: 2>, scalar_prefetch = 0 : i64, scratch_operands = 0 : i64, tpu.core_type = #tpu.core_type<tc>, window_params = [{transform_indices = @transform_0, window_bounds = array<i64: 16, 4>}, {pipeline_mode = #tpu.pipeline_mode<synchronous>, transform_indices = @transform_1, window_bounds = array<i64: 64, 128>}, {pipeline_mode = #tpu.pipeline_mode<synchronous>, transform_indices = @transform_2, window_bounds = array<i64: 32, 128>}, {transform_indices = @transform_3, window_bounds = array<i64: 16, 256>}]} {
    %c0 = arith.constant 0 : index
    %c0_0 = arith.constant 0 : index
    %0 = vector.load %arg1[%c0, %c0_0] : memref<16x4xi32, #tpu.memory_space<vmem>>, vector<16x1xi32>
    %c0_1 = arith.constant 0 : index
    %c1 = arith.constant 1 : index
    %1 = vector.load %arg1[%c0_1, %c1] : memref<16x4xi32, #tpu.memory_space<vmem>>, vector<16x1xi32>
    %c0_2 = arith.constant 0 : index
    %c2 = arith.constant 2 : index
    %2 = vector.load %arg1[%c0_2, %c2] : memref<16x4xi32, #tpu.memory_space<vmem>>, vector<16x1xi32>
    %c0_3 = arith.constant 0 : index
    %c3 = arith.constant 3 : index
    %3 = vector.load %arg1[%c0_3, %c3] : memref<16x4xi32, #tpu.memory_space<vmem>>, vector<16x1xi32>
    %4 = arith.cmpi slt, %2, %3 : vector<16x1xi32>
    %5 = tpu.iota {dimensions = array<i32: 1>} : vector<16x64xi32>
    %6 = vector.broadcast %0 : vector<16x1xi32> to vector<16x64xi32>
    %7 = arith.cmpi eq, %6, %5 : vector<16x64xi32>
    %8 = arith.extui %7 : vector<16x64xi1> to vector<16x64xi32>
    %9 = arith.sitofp %8 : vector<16x64xi32> to vector<16x64xf32>
    %10 = tpu.iota {dimensions = array<i32: 1>} : vector<16x32xi32>
    %11 = vector.broadcast %1 : vector<16x1xi32> to vector<16x32xi32>
    %12 = arith.cmpi eq, %11, %10 : vector<16x32xi32>
    %13 = arith.extui %12 : vector<16x32xi1> to vector<16x32xi32>
    %14 = arith.sitofp %13 : vector<16x32xi32> to vector<16x32xf32>
    %c0_4 = arith.constant 0 : index
    %c0_5 = arith.constant 0 : index
    %15 = vector.load %arg2[%c0_4, %c0_5] : memref<64x128xf32, #tpu.memory_space<vmem>>, vector<64x128xf32>
    %cst = arith.constant dense<0.000000e+00> : vector<16x128xf32>
    %16 = tpu.matmul %9, %15, %cst {dimension_numbers = #tpu.dot_dimension_numbers<[1], [0], [0], [1], [0, 0, 1, 1], [], []>, precision = #tpu.contract_precision<fp32>} : vector<16x64xf32>, vector<64x128xf32>, vector<16x128xf32> -> vector<16x128xf32>
    %c0_6 = arith.constant 0 : index
    %c0_7 = arith.constant 0 : index
    %17 = vector.load %arg3[%c0_6, %c0_7] : memref<32x128xf32, #tpu.memory_space<vmem>>, vector<32x128xf32>
    %cst_8 = arith.constant dense<0.000000e+00> : vector<16x128xf32>
    %18 = tpu.matmul %14, %17, %cst_8 {dimension_numbers = #tpu.dot_dimension_numbers<[1], [0], [0], [1], [0, 0, 1, 1], [], []>, precision = #tpu.contract_precision<fp32>} : vector<16x32xf32>, vector<32x128xf32>, vector<16x128xf32> -> vector<16x128xf32>
    %cst_9 = arith.constant 0.000000e+00 : f32
    %19 = vector.shape_cast %4 : vector<16x1xi1> to vector<16x1xi1>
    %20 = vector.broadcast %19 : vector<16x1xi1> to vector<16x128xi1>
    %21 = vector.broadcast %cst_9 : f32 to vector<16x128xf32>
    %22 = arith.select %20, %16, %21 : vector<16x128xi1>, vector<16x128xf32>
    %c0_10 = arith.constant 0 : index
    %c0_11 = arith.constant 0 : index
    %23 = vector.load %arg4[%c0_10, %c0_11] : memref<16x256xf32, #tpu.memory_space<vmem>>, vector<16x128xf32>
    tpu.vector_store %arg4[%c0_10, %c0_11], %22 {strides = array<i32>} : memref<16x256xf32, #tpu.memory_space<vmem>>, vector<16x128xf32>,
    %cst_12 = arith.constant 0.000000e+00 : f32
    %24 = vector.shape_cast %4 : vector<16x1xi1> to vector<16x1xi1>
    %25 = vector.broadcast %24 : vector<16x1xi1> to vector<16x128xi1>
    %26 = vector.broadcast %cst_12 : f32 to vector<16x128xf32>
    %27 = arith.select %25, %18, %26 : vector<16x128xi1>, vector<16x128xf32>
    %c0_13 = arith.constant 0 : index
    %c128 = arith.constant 128 : index
    %28 = vector.load %arg4[%c0_13, %c128] : memref<16x256xf32, #tpu.memory_space<vmem>>, vector<16x128xf32>
    tpu.vector_store %arg4[%c0_13, %c128], %27 {strides = array<i32>} : memref<16x256xf32, #tpu.memory_space<vmem>>, vector<16x128xf32>,
    return
  }
  func.func @transform_0(%arg0: i32) -> (i32, i32) {
    %c0_i32 = arith.constant 0 : i32
    %c0_i32_0 = arith.constant 0 : i32
    return %arg0, %c0_i32 : i32, i32
  }
  func.func @transform_1(%arg0: i32) -> (i32, i32) {
    %c0_i32 = arith.constant 0 : i32
    %c0_i32_0 = arith.constant 0 : i32
    %c0_i32_1 = arith.constant 0 : i32
    return %c0_i32, %c0_i32_0 : i32, i32
  }
  func.func @transform_2(%arg0: i32) -> (i32, i32) {
    %c0_i32 = arith.constant 0 : i32
    %c0_i32_0 = arith.constant 0 : i32
    %c0_i32_1 = arith.constant 0 : i32
    return %c0_i32, %c0_i32_0 : i32, i32
  }
  func.func @transform_3(%arg0: i32) -> (i32, i32) {
    %c0_i32 = arith.constant 0 : i32
    %c0_i32_0 = arith.constant 0 : i32
    return %arg0, %c0_i32 : i32, i32
  }
}

</mosaic_0001>

<llo_original>
// kernel: tpu_custom_call.1
$region0: #{tpu_custom_call.1}
  #allocation0 [shape = 'u32[]', space=smem, size = 0x4, offset = 0x4, fixed_abs, tag = 'smem constant byte address 0x4 - core index']
  #allocation1 [shape = 'u32[72,128]{1,0:T(1,128)}', space=vmem, size = 0x9000, scoped, tag = 'internal scratch']
  %s0 = inlined_call_operand.vmem [shape: s32[32,4], index: 0, kind: input, shape index: {}]
  %s1 = inlined_call_operand.hbm [shape: f32[64,128], index: 1, kind: input, shape index: {}]
  %s2 = inlined_call_operand.vmem [shape: f32[32,128], index: 2, kind: input, shape index: {}]
  %s3 = inlined_call_operand.hbm [shape: f32[32,256], index: 3, kind: output, shape index: {}]
  %s4 = sld [smem:[#allocation0]]
  $region49: #{tpu_custom_call.1} parent=0
    _
  %s6 = ssub.s32 1, %s4
  %s7 = scalar_select 0, %s6, %s4
  $region1: #{tpu_custom_call.1} parent=0
    #allocation2 [shape = 'u8[32768]{0}', space=vmem, size = 0x8000, scoped, tag = 'input window, operand 1, single buffered']
    #allocation3 [shape = 's32[2]{0}', space=sflag, size = 0x8, scoped, tag = 'scoped memory for tpu_custom_call.1']
    #allocation4 [shape = 's32[2]{0}', space=sflag, size = 0x8, scoped, tag = 'scoped memory for tpu_custom_call.1']
    #allocation5 [shape = 'u8[32768]{0}', space=vmem, size = 0x8000, scoped, tag = 'output window, operand 0']
    %8 = vsyncpa [#allocation3], 0
    %9 = vsyncpa [#allocation4], 0
    %s10 = scalar_lea.sflag [#allocation4], 1
    %11 = vsyncpa %s10, 0
    loop: start=0, step=1, limit=4
    $region2: #{tpu_custom_call.1} parent=1 // loop_pre_header
      _
    $region3: #{tpu_custom_call.1} parent=1 // loop_header
      %s13 = sphi 0, %s17
      %p14 = scmp.ge.s32.totalorder %s13, 4
      %s23 = sphi 0, %s25
      %s26 = sphi 0, %s23
      %s27 = sphi 0, %s26
      %s43 = sphi 0, %s27
      %s47 = sphi 0, %s47
      %s49 = sphi 0, %s47
      %s50 = sphi 0, %s49
      %s64 = sphi 0, %s50
      %s68 = sphi 0, %s68
      %s70 = sphi 0, %s68
      %s71 = sphi 0, %s70
      %s85 = sphi 0, %s71
      %s91 = sphi 0, %s93
      %s94 = sphi 0, %s91
      %s95 = sphi 0, %s94
      %s111 = sphi 0, %s95
    $region4: #{tpu_custom_call.1} parent=1 // loop_header_branch
      %16 = sbr.rel (%p14) target = $region8
    $region5: #{tpu_custom_call.1} parent=1 // loop_body
      %s18 = ssub.s32 %s13, 1
      %s19 = ssub.s32 %s13, 2
      %s20 = sadd.s32 %s13, 1
      %s21 = ssub.s32 %s13, %s20
      %p22 = scmp.eq.s32.totalorder %s21, 0
      %s24 = sadd.s32 %s23, 1
      %s25 = scalar_select %p22, %s23, %s24
      %p28 = pneg %p22
      %p29 = scmp.eq.s32.totalorder %s13, 1
      %p30 = por %p28, %p29
      %p31 = scmp.ne.s32.totalorder %s23, %s26
      %p32 = scmp.eq.s32.totalorder %s13, 0
      %p33 = por %p31, %p32
      %p34 = scmp.ne.s32.totalorder %s23, %s26
      %p35 = scmp.eq.s32.totalorder %s18, 1
      %p36 = por %p34, %p35
      %p37 = scmp.ne.s32.totalorder %s26, %s27
      %p38 = scmp.eq.s32.totalorder %s18, 0
      %p39 = por %p37, %p38
      %p40 = scmp.ne.s32.totalorder %s26, %s27
      %p41 = scmp.eq.s32.totalorder %s19, 1
      %p42 = por %p40, %p41
      %p44 = scmp.ne.s32.totalorder %s27, %s43
      %p45 = scmp.eq.s32.totalorder %s19, 0
      %p46 = por %p44, %p45
      %s48 = sadd.s32 %s47, 1
      %p51 = scmp.eq.s32.totalorder %s13, 1
      %p52 = scmp.ne.s32.totalorder %s47, %s49
      %p53 = scmp.eq.s32.totalorder %s13, 0
      %p54 = por %p52, %p53
      %p55 = scmp.ne.s32.totalorder %s47, %s49
      %p56 = scmp.eq.s32.totalorder %s18, 1
      %p57 = por %p55, %p56
      %p58 = scmp.ne.s32.totalorder %s49, %s50
      %p59 = scmp.eq.s32.totalorder %s18, 0
      %p60 = por %p58, %p59
      %p61 = scmp.ne.s32.totalorder %s49, %s50
      %p62 = scmp.eq.s32.totalorder %s19, 1
      %p63 = por %p61, %p62
      %p65 = scmp.ne.s32.totalorder %s50, %s64
      %p66 = scmp.eq.s32.totalorder %s19, 0
      %p67 = por %p65, %p66
      %s69 = sadd.s32 %s68, 1
      %p72 = scmp.eq.s32.totalorder %s13, 1
      %p73 = scmp.ne.s32.totalorder %s68, %s70
      %p74 = scmp.eq.s32.totalorder %s13, 0
      %p75 = por %p73, %p74
      %p76 = scmp.ne.s32.totalorder %s68, %s70
      %p77 = scmp.eq.s32.totalorder %s18, 1
      %p78 = por %p76, %p77
      %p79 = scmp.ne.s32.totalorder %s70, %s71
      %p80 = scmp.eq.s32.totalorder %s18, 0
      %p81 = por %p79, %p80
      %p82 = scmp.ne.s32.totalorder %s70, %s71
      %p83 = scmp.eq.s32.totalorder %s19, 1
      %p84 = por %p82, %p83
      %p86 = scmp.ne.s32.totalorder %s71, %s85
      %p87 = scmp.eq.s32.totalorder %s19, 0
      %p88 = por %p86, %p87
      %s89 = ssub.s32 %s13, %s20
      %p90 = scmp.eq.s32.totalorder %s89, 0
      %s92 = sadd.s32 %s91, 1
      %s93 = scalar_select %p90, %s91, %s92
      %p96 = pneg %p90
      %p97 = scmp.eq.s32.totalorder %s13, 1
      %p98 = por %p96, %p97
      %p99 = scmp.ne.s32.totalorder %s91, %s94
      %p100 = scmp.eq.s32.totalorder %s13, 0
      %p101 = por %p99, %p100
      %p102 = scmp.ne.s32.totalorder %s91, %s94
      %p103 = scmp.eq.s32.totalorder %s18, 1
      %p104 = por %p102, %p103
      %p105 = scmp.ne.s32.totalorder %s94, %s95
      %p106 = scmp.eq.s32.totalorder %s18, 0
      %p107 = por %p105, %p106
      %p108 = scmp.ne.s32.totalorder %s94, %s95
      %p109 = scmp.eq.s32.totalorder %s19, 1
      %p110 = por %p108, %p109
      %p112 = scmp.ne.s32.totalorder %s95, %s111
      %p113 = scmp.eq.s32.totalorder %s19, 0
      %p114 = por %p112, %p113
      %p115 = scmp.le.s32.totalorder 1, %s13
      %p116 = scmp.lt.s32.totalorder %s13, 3
      %p117 = pnand %p115, %p116
      %p118 = pneg %p117
      // Predicated region
      $region9: #{tpu_custom_call.1} parent=5 // pred_check
        _
      $region10: #{tpu_custom_call.1} parent=5 // pred_check_branch
        %120 = sbr.rel (%p117) target = $region12
      $region11: #{tpu_custom_call.1} parent=5 // pred_region
        %s121 = ssub.s32 %s13, 1
        // Predicated region
        $region13: #{tpu_custom_call.1} parent=11 // pred_check
          %p122 = pneg %p60
        $region14: #{tpu_custom_call.1} parent=11 // pred_check_branch
          %124 = sbr.rel (%p122) target = $region16
        $region15: #{tpu_custom_call.1} parent=11 // pred_region
          %126 = vsyncadd [#allocation3], 0
          %s127 = sshll.u32 %s1, 4
          %s128 = int_to_ptr.hbm [resolvable:$true] %s127
          %s129 = sshll.u32 [#allocation2], 4
          %s130 = int_to_ptr.vmem [resolvable:$true] %s129
          %135 = dma.hbm_to_vmem [thread:$0]  %s128, 1024, %s130, [#allocation3], 128, 128, 8
        $region16: #{tpu_custom_call.1} parent=11 // pred_fallthru
          _
        // Predicated region
        $region17: #{tpu_custom_call.1} parent=11 // pred_check
          %p136 = pneg %p81
        $region18: #{tpu_custom_call.1} parent=11 // pred_check_branch
          %138 = sbr.rel (%p136) target = $region20
        $region19: #{tpu_custom_call.1} parent=11 // pred_region
          _
        $region20: #{tpu_custom_call.1} parent=11 // pred_fallthru
          _
      $region12: #{tpu_custom_call.1} parent=5 // pred_fallthru
        _
      %p139 = scmp.lt.s32.totalorder %s13, 2
      // Predicated region
      $region21: #{tpu_custom_call.1} parent=5 // pred_check
        %p140 = pneg %p139
      $region22: #{tpu_custom_call.1} parent=5 // pred_check_branch
        %142 = sbr.rel (%p140) target = $region24
      $region23: #{tpu_custom_call.1} parent=5 // pred_region
        // Predicated region
        $region25: #{tpu_custom_call.1} parent=23 // pred_check
          %p143 = pneg %p33
        $region26: #{tpu_custom_call.1} parent=23 // pred_check_branch
          %145 = sbr.rel (%p143) target = $region28
        $region27: #{tpu_custom_call.1} parent=23 // pred_region
          %s146 = smul.u32 2, %s13
          %p147 = scmp.lt.s32.totalorder %s146, 3
          %s148 = scalar_select %p147, %s146, 3
          %s149 = smul.addr %s148, 8
          %s150 = scalar_lea.vmem %s0, %s149
          %s151 = smul.u32 2, %s13
        $region28: #{tpu_custom_call.1} parent=23 // pred_fallthru
          _
      $region24: #{tpu_custom_call.1} parent=5 // pred_fallthru
        _
      %p152 = scmp.le.s32.totalorder 1, %s13
      %p153 = scmp.lt.s32.totalorder %s13, 3
      %p154 = pnand %p152, %p153
      %p155 = pneg %p154
      // Predicated region
      $region29: #{tpu_custom_call.1} parent=5 // pred_check
        _
      $region30: #{tpu_custom_call.1} parent=5 // pred_check_branch
        %157 = sbr.rel (%p154) target = $region32
      $region31: #{tpu_custom_call.1} parent=5 // pred_region
        %s158 = ssub.s32 %s13, 1
        // Predicated region
        $region33: #{tpu_custom_call.1} parent=31 // pred_check
          %p159 = pneg %p60
        $region34: #{tpu_custom_call.1} parent=31 // pred_check_branch
          %161 = sbr.rel (%p159) target = $region36
        $region35: #{tpu_custom_call.1} parent=31 // pred_region
          %163 = dma.done [#allocation3], 1024
        $region36: #{tpu_custom_call.1} parent=31 // pred_fallthru
          _
        %s164 = smul.u32 2, %s18
        %p165 = scmp.lt.s32.totalorder %s164, 3
        %s166 = scalar_select %p165, %s164, 3
        %s167 = smul.addr %s166, 8
        %s168 = scalar_lea.vmem %s0, %s167
        %p169 = pneg %p39
        %p170 = pneg %p36
        %p171 = pneg %p60
        %p172 = pneg %p57
        %p173 = pneg %p81
        %p174 = pneg %p78
        %p175 = pneg %p107
        %p176 = pneg %p104
        %s177 = sand.u32 %s94, 1
        %s178 = scalar_lea.sflag [#allocation4], %s177
        %s179 = sand.u32 %s94, 1
        %s180 = smul.addr %s179, 32
        %s181 = scalar_lea.vmem [#allocation5], %s180
        %s182 = smul.u32 2, %s18
        %p183 = scmp.lt.s32.totalorder %s182, 3
        %s184 = scalar_select %p183, %s182, 3
        %s185 = smul.addr %s184, 8
        %s186 = scalar_lea.vmem %s0, %s185
        %s187 = smul.u32 2, %s18
        %s188 = smul.u32 2, %s18
        %v189 = vld [vmem:[%s186] sm:$0xff]
        %v190 = vld [vmem:[%s186 + $0x8] sm:$0xff]
        %191 = vrot.lane.b32.xlu0 %v189, 127
        %v192 = vpop.permute.xlu0 %191
        %193 = vrot.lane.b32.xlu0 %v190, 127
        %v194 = vpop.permute.xlu0 %193
        %vm195 = vcmp.lt.s32.totalorder %v189, %v192
        %vm196 = vcmp.lt.s32.totalorder %v190, %v194
        %v197 = vlaneseq
        %v198 = vand.u32 %v197, 127
        %199 = vset.pattern.permute.xlu0 0
        %200 = vperm.xlu0 %199, %v189
        %v201 = vpop.permute.xlu0 %200
        %202 = vset.pattern.permute.xlu0 0
        %203 = vperm.xlu0 %202, %v190
        %v204 = vpop.permute.xlu0 %203
        %vm205 = vcmp.eq.s32.totalorder %v201, %v198
        %vm206 = vcmp.eq.s32.totalorder %v204, %v198
        %v207 = vsel %vm205, 1, 0
        %v208 = vsel %vm206, 1, 0
        %v209 = vcvt.s32.f32 %v207
        %v210 = vcvt.s32.f32 %v208
        %211 = vset.pattern.permute.xlu0 1
        %212 = vperm.xlu0 %211, %v189
        %v213 = vpop.permute.xlu0 %212
        %214 = vset.pattern.permute.xlu0 1
        %215 = vperm.xlu0 %214, %v190
        %v216 = vpop.permute.xlu0 %215
        %vm217 = vcmp.eq.s32.totalorder %v213, %v198
        %vm218 = vcmp.eq.s32.totalorder %v216, %v198
        %v219 = vsel %vm217, 1, 0
        %v220 = vsel %vm218, 1, 0
        %v221 = vcvt.s32.f32 %v219
        %v222 = vcvt.s32.f32 %v220
        %v223 = vld [vmem:[#allocation2] sm:$0xff]
        %v224 = vld [vmem:[#allocation2 + $0x8] sm:$0xff]
        %v225 = vld [vmem:[#allocation2 + $0x10] sm:$0xff]
        %v226 = vld [vmem:[#allocation2 + $0x18] sm:$0xff]
        %v227 = vld [vmem:[#allocation2 + $0x20] sm:$0xff]
        %v228 = vld [vmem:[#allocation2 + $0x28] sm:$0xff]
        %v229 = vld [vmem:[#allocation2 + $0x30] sm:$0xff]
        %v230 = vld [vmem:[#allocation2 + $0x38] sm:$0xff]
        %vm231 = vcmask 523264
        %v233 = vsel %vm231, %v209, 0
        %v236 = vsel %vm231, %v210, 0
        %238 = vmatpush.msra.mxu0 0.0
        %239 = vmatpush.msra.mxu0 0.0
        %240 = vmatpush.msra.mxu0 0.0
        %241 = vmatpush.msra.mxu0 0.0
        %242 = vmatpush.msra.mxu0 0.0
        %243 = vmatpush.msra.mxu0 0.0
        %244 = vmatpush.msra.mxu0 0.0
        %245 = vmatpush.msra.mxu0 0.0
        %v246 = vand.u32 %v230, 4294901760
        %247 = vmatpush.msra.mxu0 %v246
        %v248 = vand.u32 %v229, 4294901760
        %249 = vmatpush.msra.mxu0 %v248
        %v250 = vand.u32 %v228, 4294901760
        %251 = vmatpush.msra.mxu0 %v250
        %v252 = vand.u32 %v227, 4294901760
        %253 = vmatpush.msra.mxu0 %v252
        %v254 = vand.u32 %v226, 4294901760
        %255 = vmatpush.msra.mxu0 %v254
        %v256 = vand.u32 %v225, 4294901760
        %257 = vmatpush.msra.mxu0 %v256
        %v258 = vand.u32 %v224, 4294901760
        %259 = vmatpush.msra.mxu0 %v258
        %v260 = vand.u32 %v223, 4294901760
        %261 = vmatpush.msra.mxu0 %v260
        %v262 = vand.u32 %v233, 4294901760
        %v263 = vsub.f32 %v233, %v262
        %v264 = vand.u32 %v263, 4294901760
        %v265 = vsub.f32 %v263, %v264
        %v266 = vand.u32 %v265, 4294901760
        %267 = vmatmul.f32.gmra.mxu0 %v266
        %v268 = vpop.f32.mrf.mxu0
        %v269 = vadd.f32 0.0, %v268
        %v270 = vand.u32 %v236, 4294901760
        %v271 = vsub.f32 %v236, %v270
        %v272 = vand.u32 %v271, 4294901760
        %v273 = vsub.f32 %v271, %v272
        %v274 = vand.u32 %v273, 4294901760
        %275 = vmatmul.f32.gmra.mxu0 %v274
        %v276 = vpop.f32.mrf.mxu0
        %v277 = vadd.f32 0.0, %v276
        %278 = vdwg.mxu0
        %279 = vmatpush.msra.mxu0 0.0
        %280 = vmatpush.msra.mxu0 0.0
        %281 = vmatpush.msra.mxu0 0.0
        %282 = vmatpush.msra.mxu0 0.0
        %283 = vmatpush.msra.mxu0 0.0
        %284 = vmatpush.msra.mxu0 0.0
        %285 = vmatpush.msra.mxu0 0.0
        %286 = vmatpush.msra.mxu0 0.0
        %v287 = vand.u32 %v230, 4294901760
        %v288 = vsub.f32 %v230, %v287
        %v289 = vand.u32 %v288, 4294901760
        %v290 = vsub.f32 %v288, %v289
        %v291 = vand.u32 %v290, 4294901760
        %292 = vmatpush.msra.mxu0 %v291
        %v293 = vand.u32 %v229, 4294901760
        %v294 = vsub.f32 %v229, %v293
        %v295 = vand.u32 %v294, 4294901760
        %v296 = vsub.f32 %v294, %v295
        %v297 = vand.u32 %v296, 4294901760
        %298 = vmatpush.msra.mxu0 %v297
        %v299 = vand.u32 %v228, 4294901760
        %v300 = vsub.f32 %v228, %v299
        %v301 = vand.u32 %v300, 4294901760
        %v302 = vsub.f32 %v300, %v301
        %v303 = vand.u32 %v302, 4294901760
        %304 = vmatpush.msra.mxu0 %v303
        %v305 = vand.u32 %v227, 4294901760
        %v306 = vsub.f32 %v227, %v305
        %v307 = vand.u32 %v306, 4294901760
        %v308 = vsub.f32 %v306, %v307
        %v309 = vand.u32 %v308, 4294901760
        %310 = vmatpush.msra.mxu0 %v309
        %v311 = vand.u32 %v226, 4294901760
        %v312 = vsub.f32 %v226, %v311
        %v313 = vand.u32 %v312, 4294901760
        %v314 = vsub.f32 %v312, %v313
        %v315 = vand.u32 %v314, 4294901760
        %316 = vmatpush.msra.mxu0 %v315
        %v317 = vand.u32 %v225, 4294901760
        %v318 = vsub.f32 %v225, %v317
        %v319 = vand.u32 %v318, 4294901760
        %v320 = vsub.f32 %v318, %v319
        %v321 = vand.u32 %v320, 4294901760
        %322 = vmatpush.msra.mxu0 %v321
        %v323 = vand.u32 %v224, 4294901760
        %v324 = vsub.f32 %v224, %v323
        %v325 = vand.u32 %v324, 4294901760
        %v326 = vsub.f32 %v324, %v325
        %v327 = vand.u32 %v326, 4294901760
        %328 = vmatpush.msra.mxu0 %v327
        %v329 = vand.u32 %v223, 4294901760
        %v330 = vsub.f32 %v223, %v329
        %v331 = vand.u32 %v330, 4294901760
        %v332 = vsub.f32 %v330, %v331
        %v333 = vand.u32 %v332, 4294901760
        %334 = vmatpush.msra.mxu0 %v333
        %v335 = vand.u32 %v233, 4294901760
        %336 = vmatmul.f32.gmra.mxu0 %v335
        %v337 = vpop.f32.mrf.mxu0
        %v338 = vadd.f32 %v269, %v337
        %v339 = vand.u32 %v236, 4294901760
        %340 = vmatmul.f32.gmra.mxu0 %v339
        %v341 = vpop.f32.mrf.mxu0
        %v342 = vadd.f32 %v277, %v341
        %343 = vdwg.mxu0
        %344 = vmatpush.msra.mxu0 0.0
        %345 = vmatpush.msra.mxu0 0.0
        %346 = vmatpush.msra.mxu0 0.0
        %347 = vmatpush.msra.mxu0 0.0
        %348 = vmatpush.msra.mxu0 0.0
        %349 = vmatpush.msra.mxu0 0.0
        %350 = vmatpush.msra.mxu0 0.0
        %351 = vmatpush.msra.mxu0 0.0
        %v352 = vand.u32 %v230, 4294901760
        %v353 = vsub.f32 %v230, %v352
        %354 = vmatpush.msra.mxu0 %v353
        %v355 = vand.u32 %v229, 4294901760
        %v356 = vsub.f32 %v229, %v355
        %357 = vmatpush.msra.mxu0 %v356
        %v358 = vand.u32 %v228, 4294901760
        %v359 = vsub.f32 %v228, %v358
        %360 = vmatpush.msra.mxu0 %v359
        %v361 = vand.u32 %v227, 4294901760
        %v362 = vsub.f32 %v227, %v361
        %363 = vmatpush.msra.mxu0 %v362
        %v364 = vand.u32 %v226, 4294901760
        %v365 = vsub.f32 %v226, %v364
        %366 = vmatpush.msra.mxu0 %v365
        %v367 = vand.u32 %v225, 4294901760
        %v368 = vsub.f32 %v225, %v367
        %369 = vmatpush.msra.mxu0 %v368
        %v370 = vand.u32 %v224, 4294901760
        %v371 = vsub.f32 %v224, %v370
        %372 = vmatpush.msra.mxu0 %v371
        %v373 = vand.u32 %v223, 4294901760
        %v374 = vsub.f32 %v223, %v373
        %375 = vmatpush.msra.mxu0 %v374
        %v376 = vand.u32 %v233, 4294901760
        %v377 = vsub.f32 %v233, %v376
        %378 = vmatmul.f32.gmra.mxu0 %v377
        %v379 = vpop.f32.mrf.mxu0
        %v380 = vadd.f32 %v338, %v379
        %v381 = vand.u32 %v236, 4294901760
        %v382 = vsub.f32 %v236, %v381
        %383 = vmatmul.f32.gmra.mxu0 %v382
        %v384 = vpop.f32.mrf.mxu0
        %v385 = vadd.f32 %v342, %v384
        %386 = vdwg.mxu0
        %387 = vmatpush.msra.mxu0 0.0
        %388 = vmatpush.msra.mxu0 0.0
        %389 = vmatpush.msra.mxu0 0.0
        %390 = vmatpush.msra.mxu0 0.0
        %391 = vmatpush.msra.mxu0 0.0
        %392 = vmatpush.msra.mxu0 0.0
        %393 = vmatpush.msra.mxu0 0.0
        %394 = vmatpush.msra.mxu0 0.0
        %v395 = vand.u32 %v230, 4294901760
        %396 = vmatpush.msra.mxu0 %v395
        %v397 = vand.u32 %v229, 4294901760
        %398 = vmatpush.msra.mxu0 %v397
        %v399 = vand.u32 %v228, 4294901760
        %400 = vmatpush.msra.mxu0 %v399
        %v401 = vand.u32 %v227, 4294901760
        %402 = vmatpush.msra.mxu0 %v401
        %v403 = vand.u32 %v226, 4294901760
        %404 = vmatpush.msra.mxu0 %v403
        %v405 = vand.u32 %v225, 4294901760
        %406 = vmatpush.msra.mxu0 %v405
        %v407 = vand.u32 %v224, 4294901760
        %408 = vmatpush.msra.mxu0 %v407
        %v409 = vand.u32 %v223, 4294901760
        %410 = vmatpush.msra.mxu0 %v409
        %v411 = vand.u32 %v233, 4294901760
        %v412 = vsub.f32 %v233, %v411
        %v413 = vand.u32 %v412, 4294901760
        %414 = vmatmul.f32.gmra.mxu0 %v413
        %v415 = vpop.f32.mrf.mxu0
        %v416 = vadd.f32 %v380, %v415
        %v417 = vand.u32 %v236, 4294901760
        %v418 = vsub.f32 %v236, %v417
        %v419 = vand.u32 %v418, 4294901760
        %420 = vmatmul.f32.gmra.mxu0 %v419
        %v421 = vpop.f32.mrf.mxu0
        %v422 = vadd.f32 %v385, %v421
        %423 = vdwg.mxu0
        %424 = vmatpush.msra.mxu0 0.0
        %425 = vmatpush.msra.mxu0 0.0
        %426 = vmatpush.msra.mxu0 0.0
        %427 = vmatpush.msra.mxu0 0.0
        %428 = vmatpush.msra.mxu0 0.0
        %429 = vmatpush.msra.mxu0 0.0
        %430 = vmatpush.msra.mxu0 0.0
        %431 = vmatpush.msra.mxu0 0.0
        %v432 = vand.u32 %v230, 4294901760
        %v433 = vsub.f32 %v230, %v432
        %v434 = vand.u32 %v433, 4294901760
        %435 = vmatpush.msra.mxu0 %v434
        %v436 = vand.u32 %v229, 4294901760
        %v437 = vsub.f32 %v229, %v436
        %v438 = vand.u32 %v437, 4294901760
        %439 = vmatpush.msra.mxu0 %v438
        %v440 = vand.u32 %v228, 4294901760
        %v441 = vsub.f32 %v228, %v440
        %v442 = vand.u32 %v441, 4294901760
        %443 = vmatpush.msra.mxu0 %v442
        %v444 = vand.u32 %v227, 4294901760
        %v445 = vsub.f32 %v227, %v444
        %v446 = vand.u32 %v445, 4294901760
        %447 = vmatpush.msra.mxu0 %v446
        %v448 = vand.u32 %v226, 4294901760
        %v449 = vsub.f32 %v226, %v448
        %v450 = vand.u32 %v449, 4294901760
        %451 = vmatpush.msra.mxu0 %v450
        %v452 = vand.u32 %v225, 4294901760
        %v453 = vsub.f32 %v225, %v452
        %v454 = vand.u32 %v453, 4294901760
        %455 = vmatpush.msra.mxu0 %v454
        %v456 = vand.u32 %v224, 4294901760
        %v457 = vsub.f32 %v224, %v456
        %v458 = vand.u32 %v457, 4294901760
        %459 = vmatpush.msra.mxu0 %v458
        %v460 = vand.u32 %v223, 4294901760
        %v461 = vsub.f32 %v223, %v460
        %v462 = vand.u32 %v461, 4294901760
        %463 = vmatpush.msra.mxu0 %v462
        %v464 = vand.u32 %v233, 4294901760
        %465 = vmatmul.f32.gmra.mxu0 %v464
        %v466 = vpop.f32.mrf.mxu0
        %v467 = vadd.f32 %v416, %v466
        %v468 = vand.u32 %v236, 4294901760
        %469 = vmatmul.f32.gmra.mxu0 %v468
        %v470 = vpop.f32.mrf.mxu0
        %v471 = vadd.f32 %v422, %v470
        %472 = vdwg.mxu0
        %473 = vmatpush.msra.mxu0 0.0
        %474 = vmatpush.msra.mxu0 0.0
        %475 = vmatpush.msra.mxu0 0.0
        %476 = vmatpush.msra.mxu0 0.0
        %477 = vmatpush.msra.mxu0 0.0
        %478 = vmatpush.msra.mxu0 0.0
        %479 = vmatpush.msra.mxu0 0.0
        %480 = vmatpush.msra.mxu0 0.0
        %v481 = vand.u32 %v230, 4294901760
        %482 = vmatpush.msra.mxu0 %v481
        %v483 = vand.u32 %v229, 4294901760
        %484 = vmatpush.msra.mxu0 %v483
        %v485 = vand.u32 %v228, 4294901760
        %486 = vmatpush.msra.mxu0 %v485
        %v487 = vand.u32 %v227, 4294901760
        %488 = vmatpush.msra.mxu0 %v487
        %v489 = vand.u32 %v226, 4294901760
        %490 = vmatpush.msra.mxu0 %v489
        %v491 = vand.u32 %v225, 4294901760
        %492 = vmatpush.msra.mxu0 %v491
        %v493 = vand.u32 %v224, 4294901760
        %494 = vmatpush.msra.mxu0 %v493
        %v495 = vand.u32 %v223, 4294901760
        %496 = vmatpush.msra.mxu0 %v495
        %v497 = vand.u32 %v233, 4294901760
        %498 = vmatmul.f32.gmra.mxu0 %v497
        %v499 = vpop.f32.mrf.mxu0
        %v500 = vadd.f32 %v467, %v499
        %v501 = vand.u32 %v236, 4294901760
        %502 = vmatmul.f32.gmra.mxu0 %v501
        %v503 = vpop.f32.mrf.mxu0
        %v504 = vadd.f32 %v471, %v503
        %505 = vdwg.mxu0
        %v506 = vld [vmem:[%s2] sm:$0xff]
        %v507 = vld [vmem:[%s2 + $0x8] sm:$0xff]
        %v508 = vld [vmem:[%s2 + $0x10] sm:$0xff]
        %v509 = vld [vmem:[%s2 + $0x18] sm:$0xff]
        %vm510 = vcmask 261120
        %v512 = vsel %vm510, %v221, 0
        %v515 = vsel %vm510, %v222, 0
        %517 = vmatpush.msra.mxu0 0.0
        %518 = vmatpush.msra.mxu0 0.0
        %519 = vmatpush.msra.mxu0 0.0
        %520 = vmatpush.msra.mxu0 0.0
        %521 = vmatpush.msra.mxu0 0.0
        %522 = vmatpush.msra.mxu0 0.0
        %523 = vmatpush.msra.mxu0 0.0
        %524 = vmatpush.msra.mxu0 0.0
        %525 = vmatpush.msra.mxu0 0.0
        %526 = vmatpush.msra.mxu0 0.0
        %527 = vmatpush.msra.mxu0 0.0
        %528 = vmatpush.msra.mxu0 0.0
        %v529 = vand.u32 %v509, 4294901760
        %530 = vmatpush.msra.mxu0 %v529
        %v531 = vand.u32 %v508, 4294901760
        %532 = vmatpush.msra.mxu0 %v531
        %v533 = vand.u32 %v507, 4294901760
        %534 = vmatpush.msra.mxu0 %v533
        %v535 = vand.u32 %v506, 4294901760
        %536 = vmatpush.msra.mxu0 %v535
        %v537 = vand.u32 %v512, 4294901760
        %v538 = vsub.f32 %v512, %v537
        %v539 = vand.u32 %v538, 4294901760
        %v540 = vsub.f32 %v538, %v539
        %v541 = vand.u32 %v540, 4294901760
        %542 = vmatmul.f32.gmra.mxu0 %v541
        %v543 = vpop.f32.mrf.mxu0
        %v544 = vadd.f32 0.0, %v543
        %v545 = vand.u32 %v515, 4294901760
        %v546 = vsub.f32 %v515, %v545
        %v547 = vand.u32 %v546, 4294901760
        %v548 = vsub.f32 %v546, %v547
        %v549 = vand.u32 %v548, 4294901760
        %550 = vmatmul.f32.gmra.mxu0 %v549
        %v551 = vpop.f32.mrf.mxu0
        %v552 = vadd.f32 0.0, %v551
        %553 = vdwg.mxu0
        %554 = vmatpush.msra.mxu0 0.0
        %555 = vmatpush.msra.mxu0 0.0
        %556 = vmatpush.msra.mxu0 0.0
        %557 = vmatpush.msra.mxu0 0.0
        %558 = vmatpush.msra.mxu0 0.0
        %559 = vmatpush.msra.mxu0 0.0
        %560 = vmatpush.msra.mxu0 0.0
        %561 = vmatpush.msra.mxu0 0.0
        %562 = vmatpush.msra.mxu0 0.0
        %563 = vmatpush.msra.mxu0 0.0
        %564 = vmatpush.msra.mxu0 0.0
        %565 = vmatpush.msra.mxu0 0.0
        %v566 = vand.u32 %v509, 4294901760
        %v567 = vsub.f32 %v509, %v566
        %v568 = vand.u32 %v567, 4294901760
        %v569 = vsub.f32 %v567, %v568
        %v570 = vand.u32 %v569, 4294901760
        %571 = vmatpush.msra.mxu0 %v570
        %v572 = vand.u32 %v508, 4294901760
        %v573 = vsub.f32 %v508, %v572
        %v574 = vand.u32 %v573, 4294901760
        %v575 = vsub.f32 %v573, %v574
        %v576 = vand.u32 %v575, 4294901760
        %577 = vmatpush.msra.mxu0 %v576
        %v578 = vand.u32 %v507, 4294901760
        %v579 = vsub.f32 %v507, %v578
        %v580 = vand.u32 %v579, 4294901760
        %v581 = vsub.f32 %v579, %v580
        %v582 = vand.u32 %v581, 4294901760
        %583 = vmatpush.msra.mxu0 %v582
        %v584 = vand.u32 %v506, 4294901760
        %v585 = vsub.f32 %v506, %v584
        %v586 = vand.u32 %v585, 4294901760
        %v587 = vsub.f32 %v585, %v586
        %v588 = vand.u32 %v587, 4294901760
        %589 = vmatpush.msra.mxu0 %v588
        %v590 = vand.u32 %v512, 4294901760
        %591 = vmatmul.f32.gmra.mxu0 %v590
        %v592 = vpop.f32.mrf.mxu0
        %v593 = vadd.f32 %v544, %v592
        %v594 = vand.u32 %v515, 4294901760
        %595 = vmatmul.f32.gmra.mxu0 %v594
        %v596 = vpop.f32.mrf.mxu0
        %v597 = vadd.f32 %v552, %v596
        %598 = vdwg.mxu0
        %599 = vmatpush.msra.mxu0 0.0
        %600 = vmatpush.msra.mxu0 0.0
        %601 = vmatpush.msra.mxu0 0.0
        %602 = vmatpush.msra.mxu0 0.0
        %603 = vmatpush.msra.mxu0 0.0
        %604 = vmatpush.msra.mxu0 0.0
        %605 = vmatpush.msra.mxu0 0.0
        %606 = vmatpush.msra.mxu0 0.0
        %607 = vmatpush.msra.mxu0 0.0
        %608 = vmatpush.msra.mxu0 0.0
        %609 = vmatpush.msra.mxu0 0.0
        %610 = vmatpush.msra.mxu0 0.0
        %v611 = vand.u32 %v509, 4294901760
        %v612 = vsub.f32 %v509, %v611
        %613 = vmatpush.msra.mxu0 %v612
        %v614 = vand.u32 %v508, 4294901760
        %v615 = vsub.f32 %v508, %v614
        %616 = vmatpush.msra.mxu0 %v615
        %v617 = vand.u32 %v507, 4294901760
        %v618 = vsub.f32 %v507, %v617
        %619 = vmatpush.msra.mxu0 %v618
        %v620 = vand.u32 %v506, 4294901760
        %v621 = vsub.f32 %v506, %v620
        %622 = vmatpush.msra.mxu0 %v621
        %v623 = vand.u32 %v512, 4294901760
        %v624 = vsub.f32 %v512, %v623
        %625 = vmatmul.f32.gmra.mxu0 %v624
        %v626 = vpop.f32.mrf.mxu0
        %v627 = vadd.f32 %v593, %v626
        %v628 = vand.u32 %v515, 4294901760
        %v629 = vsub.f32 %v515, %v628
        %630 = vmatmul.f32.gmra.mxu0 %v629
        %v631 = vpop.f32.mrf.mxu0
        %v632 = vadd.f32 %v597, %v631
        %633 = vdwg.mxu0
        %634 = vmatpush.msra.mxu0 0.0
        %635 = vmatpush.msra.mxu0 0.0
        %636 = vmatpush.msra.mxu0 0.0
        %637 = vmatpush.msra.mxu0 0.0
        %638 = vmatpush.msra.mxu0 0.0
        %639 = vmatpush.msra.mxu0 0.0
        %640 = vmatpush.msra.mxu0 0.0
        %641 = vmatpush.msra.mxu0 0.0
        %642 = vmatpush.msra.mxu0 0.0
        %643 = vmatpush.msra.mxu0 0.0
        %644 = vmatpush.msra.mxu0 0.0
        %645 = vmatpush.msra.mxu0 0.0
        %v646 = vand.u32 %v509, 4294901760
        %647 = vmatpush.msra.mxu0 %v646
        %v648 = vand.u32 %v508, 4294901760
        %649 = vmatpush.msra.mxu0 %v648
        %v650 = vand.u32 %v507, 4294901760
        %651 = vmatpush.msra.mxu0 %v650
        %v652 = vand.u32 %v506, 4294901760
        %653 = vmatpush.msra.mxu0 %v652
        %v654 = vand.u32 %v512, 4294901760
        %v655 = vsub.f32 %v512, %v654
        %v656 = vand.u32 %v655, 4294901760
        %657 = vmatmul.f32.gmra.mxu0 %v656
        %v658 = vpop.f32.mrf.mxu0
        %v659 = vadd.f32 %v627, %v658
        %v660 = vand.u32 %v515, 4294901760
        %v661 = vsub.f32 %v515, %v660
        %v662 = vand.u32 %v661, 4294901760
        %663 = vmatmul.f32.gmra.mxu0 %v662
        %v664 = vpop.f32.mrf.mxu0
        %v665 = vadd.f32 %v632, %v664
        %666 = vdwg.mxu0
        %667 = vmatpush.msra.mxu0 0.0
        %668 = vmatpush.msra.mxu0 0.0
        %669 = vmatpush.msra.mxu0 0.0
        %670 = vmatpush.msra.mxu0 0.0
        %671 = vmatpush.msra.mxu0 0.0
        %672 = vmatpush.msra.mxu0 0.0
        %673 = vmatpush.msra.mxu0 0.0
        %674 = vmatpush.msra.mxu0 0.0
        %675 = vmatpush.msra.mxu0 0.0
        %676 = vmatpush.msra.mxu0 0.0
        %677 = vmatpush.msra.mxu0 0.0
        %678 = vmatpush.msra.mxu0 0.0
        %v679 = vand.u32 %v509, 4294901760
        %v680 = vsub.f32 %v509, %v679
        %v681 = vand.u32 %v680, 4294901760
        %682 = vmatpush.msra.mxu0 %v681
        %v683 = vand.u32 %v508, 4294901760
        %v684 = vsub.f32 %v508, %v683
        %v685 = vand.u32 %v684, 4294901760
        %686 = vmatpush.msra.mxu0 %v685
        %v687 = vand.u32 %v507, 4294901760
        %v688 = vsub.f32 %v507, %v687
        %v689 = vand.u32 %v688, 4294901760
        %690 = vmatpush.msra.mxu0 %v689
        %v691 = vand.u32 %v506, 4294901760
        %v692 = vsub.f32 %v506, %v691
        %v693 = vand.u32 %v692, 4294901760
        %694 = vmatpush.msra.mxu0 %v693
        %v695 = vand.u32 %v512, 4294901760
        %696 = vmatmul.f32.gmra.mxu0 %v695
        %v697 = vpop.f32.mrf.mxu0
        %v698 = vadd.f32 %v659, %v697
        %v699 = vand.u32 %v515, 4294901760
        %700 = vmatmul.f32.gmra.mxu0 %v699
        %v701 = vpop.f32.mrf.mxu0
        %v702 = vadd.f32 %v665, %v701
        %703 = vdwg.mxu0
        %704 = vmatpush.msra.mxu0 0.0
        %705 = vmatpush.msra.mxu0 0.0
        %706 = vmatpush.msra.mxu0 0.0
        %707 = vmatpush.msra.mxu0 0.0
        %708 = vmatpush.msra.mxu0 0.0
        %709 = vmatpush.msra.mxu0 0.0
        %710 = vmatpush.msra.mxu0 0.0
        %711 = vmatpush.msra.mxu0 0.0
        %712 = vmatpush.msra.mxu0 0.0
        %713 = vmatpush.msra.mxu0 0.0
        %714 = vmatpush.msra.mxu0 0.0
        %715 = vmatpush.msra.mxu0 0.0
        %v716 = vand.u32 %v509, 4294901760
        %717 = vmatpush.msra.mxu0 %v716
        %v718 = vand.u32 %v508, 4294901760
        %719 = vmatpush.msra.mxu0 %v718
        %v720 = vand.u32 %v507, 4294901760
        %721 = vmatpush.msra.mxu0 %v720
        %v722 = vand.u32 %v506, 4294901760
        %723 = vmatpush.msra.mxu0 %v722
        %v724 = vand.u32 %v512, 4294901760
        %725 = vmatmul.f32.gmra.mxu0 %v724
        %v726 = vpop.f32.mrf.mxu0
        %v727 = vadd.f32 %v698, %v726
        %v728 = vand.u32 %v515, 4294901760
        %729 = vmatmul.f32.gmra.mxu0 %v728
        %v730 = vpop.f32.mrf.mxu0
        %v731 = vadd.f32 %v702, %v730
        %732 = vdwg.mxu0
        %v733 = vsel %vm195, 1, 0
        %v734 = vsel %vm196, 1, 0
        %735 = vset.pattern.permute.xlu0 2
        %736 = vperm.xlu0 %735, %v733
        %v737 = vpop.permute.xlu0 %736
        %738 = vset.pattern.permute.xlu0 2
        %739 = vperm.xlu0 %738, %v734
        %v740 = vpop.permute.xlu0 %739
        %vm741 = vcmp.eq.s32.totalorder %v737, 1
        %vm742 = vcmp.eq.s32.totalorder %v740, 1
        %v743 = vsel %vm741, %v500, 0.0
        %v744 = vsel %vm742, %v504, 0.0
        %745 = vst [vmem:[%s181] sm:$0xff] %v743
        %746 = vst [vmem:[%s181 + $0x10] sm:$0xff] %v744
        %v747 = vsel %vm741, %v727, 0.0
        %v748 = vsel %vm742, %v731, 0.0
        %749 = vst [vmem:[%s181 + $0x8] sm:$0xff] %v747
        %750 = vst [vmem:[%s181 + $0x18] sm:$0xff] %v748
        %s751 = sand.u32 %s94, 1
        %s752 = scalar_lea.sflag [#allocation4], %s751
        %s753 = sand.u32 %s94, 1
        %s754 = smul.addr %s753, 32
        %s755 = scalar_lea.vmem [#allocation5], %s754
        // Predicated region
        $region37: #{tpu_custom_call.1} parent=31 // pred_check
          %p756 = pneg %p104
        $region38: #{tpu_custom_call.1} parent=31 // pred_check_branch
          %758 = sbr.rel (%p756) target = $region40
        $region39: #{tpu_custom_call.1} parent=31 // pred_region
          %s759 = smul.u32 2, %s18
          %761 = vsyncadd %s752, 0
          %s762 = smul.addr %s759, 2
          %s763 = smul.addr %s762, 8
          %s764 = scalar_lea.hbm %s3, %s763
          %s765 = sshll.u32 %s755, 4
          %s766 = int_to_ptr.vmem [resolvable:$true] %s765
          %s767 = sshll.u32 %s764, 4
          %s768 = int_to_ptr.hbm [resolvable:$true] %s767
          %773 = dma.vmem_to_hbm [thread:$0]  %s766, 512, %s768, %s752, 256, 256, 16
        $region40: #{tpu_custom_call.1} parent=31 // pred_fallthru
          _
      $region32: #{tpu_custom_call.1} parent=5 // pred_fallthru
        _
      %p774 = scmp.le.s32.totalorder 2, %s13
      // Predicated region
      $region41: #{tpu_custom_call.1} parent=5 // pred_check
        %p775 = pneg %p774
      $region42: #{tpu_custom_call.1} parent=5 // pred_check_branch
        %777 = sbr.rel (%p775) target = $region44
      $region43: #{tpu_custom_call.1} parent=5 // pred_region
        %s778 = ssub.s32 %s13, 2
        // Predicated region
        $region45: #{tpu_custom_call.1} parent=43 // pred_check
          %p779 = pneg %p110
        $region46: #{tpu_custom_call.1} parent=43 // pred_check_branch
          %781 = sbr.rel (%p779) target = $region48
        $region47: #{tpu_custom_call.1} parent=43 // pred_region
          %s782 = sand.u32 %s95, 1
          %s783 = scalar_lea.sflag [#allocation4], %s782
          %s784 = sand.u32 %s95, 1
          %s785 = smul.addr %s784, 32
          %s786 = scalar_lea.vmem [#allocation5], %s785
          %788 = dma.done %s783, 512
        $region48: #{tpu_custom_call.1} parent=43 // pred_fallthru
          _
      $region44: #{tpu_custom_call.1} parent=5 // pred_fallthru
        _
    $region6: #{tpu_custom_call.1} parent=1 // loop_footer
      %s17 = sadd.s32 1, %s13
    $region7: #{tpu_custom_call.1} parent=1 // loop_footer_branch
      %12 = sbr.rel target = $region3
    $region8: #{tpu_custom_call.1} parent=1 // loop_exit
      _
    %789 = vsyncpa [#allocation3], 1
    %s790 = scalar_lea.sflag [#allocation3], 1
    %791 = vsyncpa %s790, 1
    %792 = vsyncpa [#allocation4], 1
    %s793 = scalar_lea.sflag [#allocation4], 1
    %794 = vsyncpa %s793, 1

</llo_original>
